<compile_context>
chip_gen: v6e
topology: v6e:2x2x1
jax: 0.10.0
libtpu: 0.0.40
codegen_flags: <defaults>
</compile_context>

<pallas_src>
import jax
import jax.numpy as jnp
from jax.experimental import pallas as pl
from jax.experimental.pallas import tpu as pltpu

EPS = 1e-5
NEG_SLOPE = 0.2


def _round_up(n, m):
    return (n + m - 1) // m * m


def _fold_bn(gamma, beta, mean, var):
    scale = (gamma / jnp.sqrt(var + EPS)).astype(jnp.float32)
    bias = (beta - mean * scale).astype(jnp.float32)
    return scale, bias


def _fold_conv3x3(w_oihw, scale, cp_out, cp_in):
    """OIHW conv weight -> BN-folded, channel-padded (cp_out, 9*cp_in) im2col weight."""
    cout, cin = w_oihw.shape[0], w_oihw.shape[1]
    w = w_oihw.astype(jnp.float32) * scale[:, None, None, None]
    w = jnp.transpose(w, (0, 2, 3, 1))                        # (Cout, 3, 3, Cin)
    w = jnp.pad(w, ((0, cp_out - cout), (0, 0), (0, 0), (0, cp_in - cin)))
    return w.reshape(cp_out, 9 * cp_in)                       # col = (ky*3+kx)*cp_in + ci


def _tap_masks(H, W, imgs_per_step, dtype):
    """Host-precomputed per-tap validity masks (hoisted out of the kernel).

    Returns a (9, 1, imgs_per_step*H*W) 0/1 array in `dtype`; per-image coords are
    used so any cross-image leakage from the fused-lane rolls is zeroed too.
    """
    HW = H * W
    pos = jnp.arange(HW, dtype=jnp.int32)
    row, col = pos // W, pos % W
    masks = []
    for ky in range(3):
        for kx in range(3):
            dy, dx = ky - 1, kx - 1
            masks.append((row + dy >= 0) & (row + dy < H) &
                         (col + dx >= 0) & (col + dx < W))
    mask = jnp.stack(masks, axis=0).astype(dtype)              # (9, HW)
    mask = jnp.tile(mask, (1, imgs_per_step))                  # (9, Bt*HW)
    return mask[:, None, :]                                    # (9, 1, Bt*HW)


def _build_kernel(H, W, imgs_per_step, cdtype, has_projection):
    HW = H * W
    n = imgs_per_step * HW

    def im2col(xf, mask_ref):
        # xf: (C, n) f32 -> (9*C, n) `cdtype` patch matrix.  Each tap is an XLU lane
        # rotation of the flattened image(s); taps are cast to the matmul operand
        # dtype and zero-masked (image border + cross-image leakage) *before* the
        # sublane concat, so the big patch only ever lives in `cdtype`.
        taps = []
        t = 0
        for ky in range(3):
            for kx in range(3):
                shift = (ky - 1) * W + (kx - 1)                # want s[i] = xf[i + shift]
                s = xf if shift == 0 else pltpu.roll(xf, (-shift) % n, axis=1)
                taps.append(s.astype(cdtype) * mask_ref[t])    # (1, n) mask broadcast
                t += 1
        return jnp.concatenate(taps, axis=0)                   # sublane-aligned concat

    def body(x_ref, w1_ref, w2_ref, ws_ref, mask_ref, bias_ref, o_ref):
        # Fuse this step's images into the lane (N) axis.
        if imgs_per_step == 1:
            xf = x_ref[0]                                      # (cp_in, HW) f32
        else:
            xf = jnp.concatenate([x_ref[b] for b in range(imgs_per_step)], axis=-1)

        # conv1 (3x3) + folded bn1 + LeakyReLU(0.2): one MXU matmul, K = 9*cp_in.
        h = jnp.dot(w1_ref[...], im2col(xf, mask_ref),
                    preferred_element_type=jnp.float32)
        h = h + bias_ref[0]
        h = jnp.where(h > 0, h, NEG_SLOPE * h)                 # f32 elementwise

        # conv2 (3x3) + folded bn2: one MXU matmul, K = 9*cp_out.
        out = jnp.dot(w2_ref[...], im2col(h, mask_ref),
                      preferred_element_type=jnp.float32)
        out = out + bias_ref[1]

        # shortcut: 1x1 conv + folded bn (projection) or true identity add.
        if has_projection:
            out = out + (jnp.dot(ws_ref[...], xf.astype(cdtype),
                                 preferred_element_type=jnp.float32) + bias_ref[2])
        else:
            out = out + xf
        out = jnp.where(out > 0, out, NEG_SLOPE * out)
        outv = out.astype(o_ref.dtype)

        if imgs_per_step == 1:
            o_ref[0] = outv                                    # lane-dense store
        else:
            for b in range(imgs_per_step):
                o_ref[b] = outv[:, b * HW:(b + 1) * HW]        # 128-aligned lane slices

    if has_projection:
        def kernel(x_ref, w1_ref, w2_ref, ws_ref, mask_ref, bias_ref, o_ref):
            body(x_ref, w1_ref, w2_ref, ws_ref, mask_ref, bias_ref, o_ref)
    else:
        def kernel(x_ref, w1_ref, w2_ref, mask_ref, bias_ref, o_ref):
            body(x_ref, w1_ref, w2_ref, None, mask_ref, bias_ref, o_ref)
    return kernel


def residual_block_forward(x_nchw, p, *, compute_dtype=jnp.float32):
    """ResidualBlock forward (eval-mode BN). x_nchw: (B, Cin, H, W) f32, NCHW in/out.

    compute_dtype: dtype of the MXU matmul operands (weights + im2col patch).
    f32 is the safe default (and best for v5e); bf16 is recommended on v6e/v7x.
    """
    B, Cin, H, W = x_nchw.shape
    Cout = p["w1"].shape[0]
    HW = H * W
    has_projection = "ws" in p
    if not has_projection:
        assert Cin == Cout, "identity shortcut requires Cin == Cout"

    itemsize_c = jnp.dtype(compute_dtype).itemsize
    # bf16 packs 16 rows per vreg -> pad channels to 16 on the bf16 path, 8 for f32.
    align = 16 if itemsize_c < 4 else 8
    cp_in = _round_up(Cin, align)
    cp_out = _round_up(Cout, align)

    # --- how many whole images to fuse into one grid step's lane axis ---
    # Wider N amortizes per-grid-step overhead and MXU weight pushes; keep >= 2 grid
    # steps when B >= 2 (v7x has 2 TensorCores sharded via the "parallel" axis) and
    # cap the fused width so the live im2col patch stays well inside VMEM.
    patch_per_image = 9 * max(cp_in, cp_out) * HW * itemsize_c
    imgs_per_step = max(1, min(B, (8 * 2**20) // max(patch_per_image, 1)))
    if B >= 2:
        imgs_per_step = min(imgs_per_step, pl.cdiv(B, 2))
    grid_n = pl.cdiv(B, imgs_per_step)
    Bp = grid_n * imgs_per_step
    n_step = imgs_per_step * HW

    # Fold BN (running stats) into conv weights; remaining biases go into one array.
    s1, b1 = _fold_bn(p["g1"], p["b1"], p["m1"], p["v1"])
    s2, b2 = _fold_bn(p["g2"], p["b2"], p["m2"], p["v2"])
    w1f = _fold_conv3x3(p["w1"], s1, cp_out, cp_in).astype(compute_dtype)
    w2f = _fold_conv3x3(p["w2"], s2, cp_out, cp_out).astype(compute_dtype)

    if has_projection:
        ss, bs = _fold_bn(p["gs"], p["bs"], p["ms"], p["vs"])
        ws = p["ws"][:, :, 0, 0].astype(jnp.float32) * ss[:, None]
        wsf = jnp.pad(ws, ((0, cp_out - Cout), (0, cp_in - Cin))).astype(compute_dtype)
    else:
        bs = jnp.zeros((Cout,), jnp.float32)
        wsf = None

    bias = jnp.stack([b1, b2, bs], axis=0)[:, :, None]              # (3, Cout, 1)
    bias = jnp.pad(bias, ((0, 0), (0, cp_out - Cout), (0, 0)))      # (3, cp_out, 1)

    mask = _tap_masks(H, W, imgs_per_step, compute_dtype)           # (9, 1, n_step)

    # NCHW -> (B, C, H*W): pure reshape (no host transpose); pad channels to the
    # alignment and batch to a multiple of imgs_per_step (zero images, sliced off).
    x = x_nchw.reshape(B, Cin, HW).astype(jnp.float32)
    x = jnp.pad(x, ((0, Bp - B), (0, cp_in - Cin), (0, 0)))

    kernel = _build_kernel(H, W, imgs_per_step, compute_dtype, has_projection)

    # Constant-index weight/mask/bias blocks are single-buffered (their block index
    # never changes across the grid); activations keep default double buffering.
    const = dict(pipeline_mode=pl.Buffered(1))
    in_specs = [
        pl.BlockSpec((imgs_per_step, cp_in, HW), lambda g: (g, 0, 0)),
        pl.BlockSpec((cp_out, 9 * cp_in), lambda g: (0, 0), **const),
        pl.BlockSpec((cp_out, 9 * cp_out), lambda g: (0, 0), **const),
    ]
    inputs = [x, w1f, w2f]
    if has_projection:
        in_specs.append(pl.BlockSpec((cp_out, cp_in), lambda g: (0, 0), **const))
        inputs.append(wsf)
    in_specs.append(pl.BlockSpec((9, 1, n_step), lambda g: (0, 0, 0), **const))
    inputs.append(mask)
    in_specs.append(pl.BlockSpec((3, cp_out, 1), lambda g: (0, 0, 0), **const))
    inputs.append(bias)

    # Explicit scoped-VMEM budget with headroom (v7x only has 64 MiB physical).
    est = (2 * imgs_per_step * (cp_in + cp_out) * HW * 4                 # x / out blocks (2x buffered)
           + (9 * cp_in + 9 * cp_out + cp_in) * cp_out * itemsize_c      # weights (1x buffered)
           + 9 * n_step * itemsize_c + 3 * cp_out * 4                    # mask + bias
           + 2 * 9 * max(cp_in, cp_out) * n_step * itemsize_c            # live im2col patches
           + 4 * cp_out * n_step * 4)                                    # f32 matmul results / temps
    vmem_limit = int(min(64 * 2**20, max(32 * 2**20, 2 * est)))

    out = pl.pallas_call(
        kernel,
        out_shape=jax.ShapeDtypeStruct((Bp, cp_out, HW), jnp.float32),
        grid=(grid_n,),
        in_specs=in_specs,
        out_specs=pl.BlockSpec((imgs_per_step, cp_out, HW), lambda g: (g, 0, 0)),
        compiler_params=pltpu.CompilerParams(
            dimension_semantics=("parallel",),
            vmem_limit_bytes=vmem_limit),
    )(*inputs)

    # (Bp, cp_out, H*W) -> NCHW: batch/channel slice + reshape only (no transpose).
    if Bp != B:
        out = out[:B]
    if cp_out != Cout:
        out = out[:, :Cout, :]
    return out.reshape(B, Cout, H, W)


# ------------------------- plain-JAX reference (for checking) -------------------------
def _ref_forward(x, p):
    def conv(x, w):
        return jax.lax.conv_general_dilated(
            x, w, (1, 1), "SAME",
            dimension_numbers=("NCHW", "OIHW", "NCHW"),
            precision=jax.lax.Precision.HIGHEST)

    def bn(x, g, b, m, v):
        g, b, m, v = (a[None, :, None, None] for a in (g, b, m, v))
        return (x - m) / jnp.sqrt(v + EPS) * g + b

    def lrelu(x):
        return jnp.where(x > 0, x, NEG_SLOPE * x)

    out = lrelu(bn(conv(x, p["w1"]), p["g1"], p["b1"], p["m1"], p["v1"]))
    out = bn(conv(out, p["w2"]), p["g2"], p["b2"], p["m2"], p["v2"])
    sc = bn(conv(x, p["ws"]), p["gs"], p["bs"], p["ms"], p["vs"]) if "ws" in p else x
    return lrelu(out + sc)


def _init_params(key, cin, cout):
    ks = jax.random.split(key, 16)
    f32 = jnp.float32
    p = {
        "w1": jax.random.normal(ks[0], (cout, cin, 3, 3), f32) * 0.1,
        "w2": jax.random.normal(ks[1], (cout, cout, 3, 3), f32) * 0.1,
    }
    tags = ["1", "2"]
    if cin != cout:     # ResidualBlock only builds the 1x1-conv shortcut in this case
        p["ws"] = jax.random.normal(ks[2], (cout, cin, 1, 1), f32) * 0.1
        tags.append("s")
    for i, tag in enumerate(tags):
        base = 3 + 4 * i
        p["g" + tag] = 1.0 + 0.1 * jax.random.normal(ks[base + 0], (cout,), f32)
        p["b" + tag] = 0.1 * jax.random.normal(ks[base + 1], (cout,), f32)
        p["m" + tag] = 0.1 * jax.random.normal(ks[base + 2], (cout,), f32)
        p["v" + tag] = jax.random.uniform(ks[base + 3], (cout,), f32, 0.5, 1.5)
    return p


if __name__ == "__main__":
    B, Cin, Cout, H, W = 2, 4, 8, 16, 16   # Cin != Cout -> 1x1-conv + BN shortcut

    key = jax.random.PRNGKey(0)
    kx, kp = jax.random.split(key)
    x = jax.random.normal(kx, (B, Cin, H, W), jnp.float32)
    params = _init_params(kp, Cin, Cout)
    ref = jax.block_until_ready(_ref_forward(x, params))

    # f32 path (default; safest on v5e)
    out = jax.block_until_ready(residual_block_forward(x, params))
    assert out.shape == (B, Cout, H, W)
    assert jnp.allclose(out, ref, atol=1e-2, rtol=1e-2), \
        f"f32 max abs diff {jnp.max(jnp.abs(out - ref))}"

    # bf16 MXU-operand path (v6e/v7x): bf16 patch/weights, f32 accumulation + elementwise.
    out_bf16 = jax.block_until_ready(
        residual_block_forward(x, params, compute_dtype=jnp.bfloat16))
    assert jnp.allclose(out_bf16, ref, atol=1e-1, rtol=1e-1), \
        f"bf16 max abs diff {jnp.max(jnp.abs(out_bf16 - ref))}"

    # identity-shortcut path + multi-image lane fusion (B=4 -> 2 images per grid step)
    x2 = jax.random.normal(kx, (4, Cout, H, W), jnp.float32)
    params_id = _init_params(kp, Cout, Cout)
    out_id = jax.block_until_ready(residual_block_forward(x2, params_id))
    ref_id = jax.block_until_ready(_ref_forward(x2, params_id))
    assert jnp.allclose(out_id, ref_id, atol=1e-2, rtol=1e-2), \
        f"identity max abs diff {jnp.max(jnp.abs(out_id - ref_id))}"

    print("KERNEL_OK")
</pallas_src>

<mosaic_0001>
module attributes {stable_mosaic.version = 11 : i64} {
  func.func @kernel(%arg0: i32, %arg1: memref<1x8x256xf32, #tpu.memory_space<vmem>>, %arg2: memref<8x72xf32, #tpu.memory_space<vmem>>, %arg3: memref<8x72xf32, #tpu.memory_space<vmem>>, %arg4: memref<8x8xf32, #tpu.memory_space<vmem>>, %arg5: memref<9x1x256xf32, #tpu.memory_space<vmem>>, %arg6: memref<3x8x1xf32, #tpu.memory_space<vmem>>, %arg7: memref<1x8x256xf32, #tpu.memory_space<vmem>>) attributes {dimension_semantics = [#tpu.dimension_semantics<parallel>], iteration_bounds = array<i64: 2>, scalar_prefetch = 0 : i64, scratch_operands = 0 : i64, tpu.core_type = #tpu.core_type<tc>, window_params = [{transform_indices = @transform_0, window_bounds = array<i64: 1, 8, 256>}, {pipeline_mode = #tpu.pipeline_mode<synchronous>, transform_indices = @transform_1, window_bounds = array<i64: 8, 72>}, {pipeline_mode = #tpu.pipeline_mode<synchronous>, transform_indices = @transform_2, window_bounds = array<i64: 8, 72>}, {pipeline_mode = #tpu.pipeline_mode<synchronous>, transform_indices = @transform_3, window_bounds = array<i64: 8, 8>}, {pipeline_mode = #tpu.pipeline_mode<synchronous>, transform_indices = @transform_4, window_bounds = array<i64: 9, 1, 256>}, {pipeline_mode = #tpu.pipeline_mode<synchronous>, transform_indices = @transform_5, window_bounds = array<i64: 3, 8, 1>}, {transform_indices = @transform_6, window_bounds = array<i64: 1, 8, 256>}]} {
    %c0 = arith.constant 0 : index
    %c0_0 = arith.constant 0 : index
    %c0_1 = arith.constant 0 : index
    %0 = vector.load %arg1[%c0, %c0_0, %c0_1] : memref<1x8x256xf32, #tpu.memory_space<vmem>>, vector<1x8x256xf32>
    %1 = vector.shape_cast %0 : vector<1x8x256xf32> to vector<8x256xf32>
    %c0_2 = arith.constant 0 : index
    %c0_3 = arith.constant 0 : index
    %2 = vector.load %arg2[%c0_2, %c0_3] : memref<8x72xf32, #tpu.memory_space<vmem>>, vector<8x72xf32>
    %c17_i32 = arith.constant 17 : i32
    %3 = tpu.dynamic_rotate %1 by %c17_i32 dim 1 : vector<8x256xf32>, i32 -> vector<8x256xf32>
    %c0_4 = arith.constant 0 : index
    %c0_5 = arith.constant 0 : index
    %c0_6 = arith.constant 0 : index
    %4 = vector.load %arg5[%c0_4, %c0_5, %c0_6] : memref<9x1x256xf32, #tpu.memory_space<vmem>>, vector<1x1x256xf32>
    %5 = vector.shape_cast %4 : vector<1x1x256xf32> to vector<1x256xf32>
    %6 = vector.broadcast %5 : vector<1x256xf32> to vector<8x256xf32>
    %7 = arith.mulf %3, %6 : vector<8x256xf32>
    %c16_i32 = arith.constant 16 : i32
    %8 = tpu.dynamic_rotate %1 by %c16_i32 dim 1 : vector<8x256xf32>, i32 -> vector<8x256xf32>
    %c1 = arith.constant 1 : index
    %c0_7 = arith.constant 0 : index
    %c0_8 = arith.constant 0 : index
    %9 = vector.load %arg5[%c1, %c0_7, %c0_8] : memref<9x1x256xf32, #tpu.memory_space<vmem>>, vector<1x1x256xf32>
    %10 = vector.shape_cast %9 : vector<1x1x256xf32> to vector<1x256xf32>
    %11 = vector.broadcast %10 : vector<1x256xf32> to vector<8x256xf32>
    %12 = arith.mulf %8, %11 : vector<8x256xf32>
    %c15_i32 = arith.constant 15 : i32
    %13 = tpu.dynamic_rotate %1 by %c15_i32 dim 1 : vector<8x256xf32>, i32 -> vector<8x256xf32>
    %c2 = arith.constant 2 : index
    %c0_9 = arith.constant 0 : index
    %c0_10 = arith.constant 0 : index
    %14 = vector.load %arg5[%c2, %c0_9, %c0_10] : memref<9x1x256xf32, #tpu.memory_space<vmem>>, vector<1x1x256xf32>
    %15 = vector.shape_cast %14 : vector<1x1x256xf32> to vector<1x256xf32>
    %16 = vector.broadcast %15 : vector<1x256xf32> to vector<8x256xf32>
    %17 = arith.mulf %13, %16 : vector<8x256xf32>
    %c1_i32 = arith.constant 1 : i32
    %18 = tpu.dynamic_rotate %1 by %c1_i32 dim 1 : vector<8x256xf32>, i32 -> vector<8x256xf32>
    %c3 = arith.constant 3 : index
    %c0_11 = arith.constant 0 : index
    %c0_12 = arith.constant 0 : index
    %19 = vector.load %arg5[%c3, %c0_11, %c0_12] : memref<9x1x256xf32, #tpu.memory_space<vmem>>, vector<1x1x256xf32>
    %20 = vector.shape_cast %19 : vector<1x1x256xf32> to vector<1x256xf32>
    %21 = vector.broadcast %20 : vector<1x256xf32> to vector<8x256xf32>
    %22 = arith.mulf %18, %21 : vector<8x256xf32>
    %c4 = arith.constant 4 : index
    %c0_13 = arith.constant 0 : index
    %c0_14 = arith.constant 0 : index
    %23 = vector.load %arg5[%c4, %c0_13, %c0_14] : memref<9x1x256xf32, #tpu.memory_space<vmem>>, vector<1x1x256xf32>
    %24 = vector.shape_cast %23 : vector<1x1x256xf32> to vector<1x256xf32>
    %25 = vector.broadcast %24 : vector<1x256xf32> to vector<8x256xf32>
    %26 = arith.mulf %1, %25 : vector<8x256xf32>
    %c255_i32 = arith.constant 255 : i32
    %27 = tpu.dynamic_rotate %1 by %c255_i32 dim 1 : vector<8x256xf32>, i32 -> vector<8x256xf32>
    %c5 = arith.constant 5 : index
    %c0_15 = arith.constant 0 : index
    %c0_16 = arith.constant 0 : index
    %28 = vector.load %arg5[%c5, %c0_15, %c0_16] : memref<9x1x256xf32, #tpu.memory_space<vmem>>, vector<1x1x256xf32>
    %29 = vector.shape_cast %28 : vector<1x1x256xf32> to vector<1x256xf32>
    %30 = vector.broadcast %29 : vector<1x256xf32> to vector<8x256xf32>
    %31 = arith.mulf %27, %30 : vector<8x256xf32>
    %c241_i32 = arith.constant 241 : i32
    %32 = tpu.dynamic_rotate %1 by %c241_i32 dim 1 : vector<8x256xf32>, i32 -> vector<8x256xf32>
    %c6 = arith.constant 6 : index
    %c0_17 = arith.constant 0 : index
    %c0_18 = arith.constant 0 : index
    %33 = vector.load %arg5[%c6, %c0_17, %c0_18] : memref<9x1x256xf32, #tpu.memory_space<vmem>>, vector<1x1x256xf32>
    %34 = vector.shape_cast %33 : vector<1x1x256xf32> to vector<1x256xf32>
    %35 = vector.broadcast %34 : vector<1x256xf32> to vector<8x256xf32>
    %36 = arith.mulf %32, %35 : vector<8x256xf32>
    %c240_i32 = arith.constant 240 : i32
    %37 = tpu.dynamic_rotate %1 by %c240_i32 dim 1 : vector<8x256xf32>, i32 -> vector<8x256xf32>
    %c7 = arith.constant 7 : index
    %c0_19 = arith.constant 0 : index
    %c0_20 = arith.constant 0 : index
    %38 = vector.load %arg5[%c7, %c0_19, %c0_20] : memref<9x1x256xf32, #tpu.memory_space<vmem>>, vector<1x1x256xf32>
    %39 = vector.shape_cast %38 : vector<1x1x256xf32> to vector<1x256xf32>
    %40 = vector.broadcast %39 : vector<1x256xf32> to vector<8x256xf32>
    %41 = arith.mulf %37, %40 : vector<8x256xf32>
    %c239_i32 = arith.constant 239 : i32
    %42 = tpu.dynamic_rotate %1 by %c239_i32 dim 1 : vector<8x256xf32>, i32 -> vector<8x256xf32>
    %c8 = arith.constant 8 : index
    %c0_21 = arith.constant 0 : index
    %c0_22 = arith.constant 0 : index
    %43 = vector.load %arg5[%c8, %c0_21, %c0_22] : memref<9x1x256xf32, #tpu.memory_space<vmem>>, vector<1x1x256xf32>
    %44 = vector.shape_cast %43 : vector<1x1x256xf32> to vector<1x256xf32>
    %45 = vector.broadcast %44 : vector<1x256xf32> to vector<8x256xf32>
    %46 = arith.mulf %42, %45 : vector<8x256xf32>
    %47 = tpu.concatenate %7, %12, %17, %22, %26, %31, %36, %41, %46 in 0 : vector<8x256xf32>, vector<8x256xf32>, vector<8x256xf32>, vector<8x256xf32>, vector<8x256xf32>, vector<8x256xf32>, vector<8x256xf32>, vector<8x256xf32>, vector<8x256xf32> -> vector<72x256xf32>
    %cst = arith.constant dense<0.000000e+00> : vector<8x256xf32>
    %48 = tpu.matmul %2, %47, %cst {dimension_numbers = #tpu.dot_dimension_numbers<[1], [0], [0], [1], [0, 0, 1, 1], [], []>} : vector<8x72xf32>, vector<72x256xf32>, vector<8x256xf32> -> vector<8x256xf32>
    %c0_23 = arith.constant 0 : index
    %c0_24 = arith.constant 0 : index
    %c0_25 = arith.constant 0 : index
    %49 = vector.load %arg6[%c0_23, %c0_24, %c0_25] : memref<3x8x1xf32, #tpu.memory_space<vmem>>, vector<1x8x1xf32>
    %50 = vector.shape_cast %49 : vector<1x8x1xf32> to vector<8x1xf32>
    %51 = vector.broadcast %50 : vector<8x1xf32> to vector<8x256xf32>
    %52 = arith.addf %48, %51 : vector<8x256xf32>
    %cst_26 = arith.constant 0.000000e+00 : f32
    %53 = vector.broadcast %cst_26 : f32 to vector<8x256xf32>
    %54 = arith.cmpf ogt, %52, %53 : vector<8x256xf32>
    %cst_27 = arith.constant 2.000000e-01 : f32
    %55 = vector.broadcast %cst_27 : f32 to vector<8x256xf32>
    %56 = arith.mulf %55, %52 : vector<8x256xf32>
    %57 = arith.select %54, %52, %56 : vector<8x256xi1>, vector<8x256xf32>
    %c0_28 = arith.constant 0 : index
    %c0_29 = arith.constant 0 : index
    %58 = vector.load %arg3[%c0_28, %c0_29] : memref<8x72xf32, #tpu.memory_space<vmem>>, vector<8x72xf32>
    %c17_i32_30 = arith.constant 17 : i32
    %59 = tpu.dynamic_rotate %57 by %c17_i32_30 dim 1 : vector<8x256xf32>, i32 -> vector<8x256xf32>
    %c0_31 = arith.constant 0 : index
    %c0_32 = arith.constant 0 : index
    %c0_33 = arith.constant 0 : index
    %60 = vector.load %arg5[%c0_31, %c0_32, %c0_33] : memref<9x1x256xf32, #tpu.memory_space<vmem>>, vector<1x1x256xf32>
    %61 = vector.shape_cast %60 : vector<1x1x256xf32> to vector<1x256xf32>
    %62 = vector.broadcast %61 : vector<1x256xf32> to vector<8x256xf32>
    %63 = arith.mulf %59, %62 : vector<8x256xf32>
    %c16_i32_34 = arith.constant 16 : i32
    %64 = tpu.dynamic_rotate %57 by %c16_i32_34 dim 1 : vector<8x256xf32>, i32 -> vector<8x256xf32>
    %c1_35 = arith.constant 1 : index
    %c0_36 = arith.constant 0 : index
    %c0_37 = arith.constant 0 : index
    %65 = vector.load %arg5[%c1_35, %c0_36, %c0_37] : memref<9x1x256xf32, #tpu.memory_space<vmem>>, vector<1x1x256xf32>
    %66 = vector.shape_cast %65 : vector<1x1x256xf32> to vector<1x256xf32>
    %67 = vector.broadcast %66 : vector<1x256xf32> to vector<8x256xf32>
    %68 = arith.mulf %64, %67 : vector<8x256xf32>
    %c15_i32_38 = arith.constant 15 : i32
    %69 = tpu.dynamic_rotate %57 by %c15_i32_38 dim 1 : vector<8x256xf32>, i32 -> vector<8x256xf32>
    %c2_39 = arith.constant 2 : index
    %c0_40 = arith.constant 0 : index
    %c0_41 = arith.constant 0 : index
    %70 = vector.load %arg5[%c2_39, %c0_40, %c0_41] : memref<9x1x256xf32, #tpu.memory_space<vmem>>, vector<1x1x256xf32>
    %71 = vector.shape_cast %70 : vector<1x1x256xf32> to vector<1x256xf32>
    %72 = vector.broadcast %71 : vector<1x256xf32> to vector<8x256xf32>
    %73 = arith.mulf %69, %72 : vector<8x256xf32>
    %c1_i32_42 = arith.constant 1 : i32
    %74 = tpu.dynamic_rotate %57 by %c1_i32_42 dim 1 : vector<8x256xf32>, i32 -> vector<8x256xf32>
    %c3_43 = arith.constant 3 : index
    %c0_44 = arith.constant 0 : index
    %c0_45 = arith.constant 0 : index
    %75 = vector.load %arg5[%c3_43, %c0_44, %c0_45] : memref<9x1x256xf32, #tpu.memory_space<vmem>>, vector<1x1x256xf32>
    %76 = vector.shape_cast %75 : vector<1x1x256xf32> to vector<1x256xf32>
    %77 = vector.broadcast %76 : vector<1x256xf32> to vector<8x256xf32>
    %78 = arith.mulf %74, %77 : vector<8x256xf32>
    %c4_46 = arith.constant 4 : index
    %c0_47 = arith.constant 0 : index
    %c0_48 = arith.constant 0 : index
    %79 = vector.load %arg5[%c4_46, %c0_47, %c0_48] : memref<9x1x256xf32, #tpu.memory_space<vmem>>, vector<1x1x256xf32>
    %80 = vector.shape_cast %79 : vector<1x1x256xf32> to vector<1x256xf32>
    %81 = vector.broadcast %80 : vector<1x256xf32> to vector<8x256xf32>
    %82 = arith.mulf %57, %81 : vector<8x256xf32>
    %c255_i32_49 = arith.constant 255 : i32
    %83 = tpu.dynamic_rotate %57 by %c255_i32_49 dim 1 : vector<8x256xf32>, i32 -> vector<8x256xf32>
    %c5_50 = arith.constant 5 : index
    %c0_51 = arith.constant 0 : index
    %c0_52 = arith.constant 0 : index
    %84 = vector.load %arg5[%c5_50, %c0_51, %c0_52] : memref<9x1x256xf32, #tpu.memory_space<vmem>>, vector<1x1x256xf32>
    %85 = vector.shape_cast %84 : vector<1x1x256xf32> to vector<1x256xf32>
    %86 = vector.broadcast %85 : vector<1x256xf32> to vector<8x256xf32>
    %87 = arith.mulf %83, %86 : vector<8x256xf32>
    %c241_i32_53 = arith.constant 241 : i32
    %88 = tpu.dynamic_rotate %57 by %c241_i32_53 dim 1 : vector<8x256xf32>, i32 -> vector<8x256xf32>
    %c6_54 = arith.constant 6 : index
    %c0_55 = arith.constant 0 : index
    %c0_56 = arith.constant 0 : index
    %89 = vector.load %arg5[%c6_54, %c0_55, %c0_56] : memref<9x1x256xf32, #tpu.memory_space<vmem>>, vector<1x1x256xf32>
    %90 = vector.shape_cast %89 : vector<1x1x256xf32> to vector<1x256xf32>
    %91 = vector.broadcast %90 : vector<1x256xf32> to vector<8x256xf32>
    %92 = arith.mulf %88, %91 : vector<8x256xf32>
    %c240_i32_57 = arith.constant 240 : i32
    %93 = tpu.dynamic_rotate %57 by %c240_i32_57 dim 1 : vector<8x256xf32>, i32 -> vector<8x256xf32>
    %c7_58 = arith.constant 7 : index
    %c0_59 = arith.constant 0 : index
    %c0_60 = arith.constant 0 : index
    %94 = vector.load %arg5[%c7_58, %c0_59, %c0_60] : memref<9x1x256xf32, #tpu.memory_space<vmem>>, vector<1x1x256xf32>
    %95 = vector.shape_cast %94 : vector<1x1x256xf32> to vector<1x256xf32>
    %96 = vector.broadcast %95 : vector<1x256xf32> to vector<8x256xf32>
    %97 = arith.mulf %93, %96 : vector<8x256xf32>
    %c239_i32_61 = arith.constant 239 : i32
    %98 = tpu.dynamic_rotate %57 by %c239_i32_61 dim 1 : vector<8x256xf32>, i32 -> vector<8x256xf32>
    %c8_62 = arith.constant 8 : index
    %c0_63 = arith.constant 0 : index
    %c0_64 = arith.constant 0 : index
    %99 = vector.load %arg5[%c8_62, %c0_63, %c0_64] : memref<9x1x256xf32, #tpu.memory_space<vmem>>, vector<1x1x256xf32>
    %100 = vector.shape_cast %99 : vector<1x1x256xf32> to vector<1x256xf32>
    %101 = vector.broadcast %100 : vector<1x256xf32> to vector<8x256xf32>
    %102 = arith.mulf %98, %101 : vector<8x256xf32>
    %103 = tpu.concatenate %63, %68, %73, %78, %82, %87, %92, %97, %102 in 0 : vector<8x256xf32>, vector<8x256xf32>, vector<8x256xf32>, vector<8x256xf32>, vector<8x256xf32>, vector<8x256xf32>, vector<8x256xf32>, vector<8x256xf32>, vector<8x256xf32> -> vector<72x256xf32>
    %cst_65 = arith.constant dense<0.000000e+00> : vector<8x256xf32>
    %104 = tpu.matmul %58, %103, %cst_65 {dimension_numbers = #tpu.dot_dimension_numbers<[1], [0], [0], [1], [0, 0, 1, 1], [], []>} : vector<8x72xf32>, vector<72x256xf32>, vector<8x256xf32> -> vector<8x256xf32>
    %c1_66 = arith.constant 1 : index
    %c0_67 = arith.constant 0 : index
    %c0_68 = arith.constant 0 : index
    %105 = vector.load %arg6[%c1_66, %c0_67, %c0_68] : memref<3x8x1xf32, #tpu.memory_space<vmem>>, vector<1x8x1xf32>
    %106 = vector.shape_cast %105 : vector<1x8x1xf32> to vector<8x1xf32>
    %107 = vector.broadcast %106 : vector<8x1xf32> to vector<8x256xf32>
    %108 = arith.addf %104, %107 : vector<8x256xf32>
    %c0_69 = arith.constant 0 : index
    %c0_70 = arith.constant 0 : index
    %109 = vector.load %arg4[%c0_69, %c0_70] : memref<8x8xf32, #tpu.memory_space<vmem>>, vector<8x8xf32>
    %cst_71 = arith.constant dense<0.000000e+00> : vector<8x256xf32>
    %110 = tpu.matmul %109, %1, %cst_71 {dimension_numbers = #tpu.dot_dimension_numbers<[1], [0], [0], [1], [0, 0, 1, 1], [], []>} : vector<8x8xf32>, vector<8x256xf32>, vector<8x256xf32> -> vector<8x256xf32>
    %c2_72 = arith.constant 2 : index
    %c0_73 = arith.constant 0 : index
    %c0_74 = arith.constant 0 : index
    %111 = vector.load %arg6[%c2_72, %c0_73, %c0_74] : memref<3x8x1xf32, #tpu.memory_space<vmem>>, vector<1x8x1xf32>
    %112 = vector.shape_cast %111 : vector<1x8x1xf32> to vector<8x1xf32>
    %113 = vector.broadcast %112 : vector<8x1xf32> to vector<8x256xf32>
    %114 = arith.addf %110, %113 : vector<8x256xf32>
    %115 = arith.addf %108, %114 : vector<8x256xf32>
    %cst_75 = arith.constant 0.000000e+00 : f32
    %116 = vector.broadcast %cst_75 : f32 to vector<8x256xf32>
    %117 = arith.cmpf ogt, %115, %116 : vector<8x256xf32>
    %cst_76 = arith.constant 2.000000e-01 : f32
    %118 = vector.broadcast %cst_76 : f32 to vector<8x256xf32>
    %119 = arith.mulf %118, %115 : vector<8x256xf32>
    %120 = arith.select %117, %115, %119 : vector<8x256xi1>, vector<8x256xf32>
    %c0_77 = arith.constant 0 : index
    %c0_78 = arith.constant 0 : index
    %c0_79 = arith.constant 0 : index
    %121 = vector.load %arg7[%c0_77, %c0_78, %c0_79] : memref<1x8x256xf32, #tpu.memory_space<vmem>>, vector<1x8x256xf32>
    %122 = vector.shape_cast %121 : vector<1x8x256xf32> to vector<8x256xf32>
    %123 = vector.shape_cast %120 : vector<8x256xf32> to vector<1x8x256xf32>
    tpu.vector_store %arg7[%c0_77, %c0_78, %c0_79], %123 {strides = array<i32>} : memref<1x8x256xf32, #tpu.memory_space<vmem>>, vector<1x8x256xf32>,
    return
  }
  func.func @transform_0(%arg0: i32) -> (i32, i32, i32) {
    %c0_i32 = arith.constant 0 : i32
    %c0_i32_0 = arith.constant 0 : i32
    %c0_i32_1 = arith.constant 0 : i32
    return %arg0, %c0_i32, %c0_i32_0 : i32, i32, i32
  }
  func.func @transform_1(%arg0: i32) -> (i32, i32) {
    %c0_i32 = arith.constant 0 : i32
    %c0_i32_0 = arith.constant 0 : i32
    %c0_i32_1 = arith.constant 0 : i32
    return %c0_i32, %c0_i32_0 : i32, i32
  }
  func.func @transform_2(%arg0: i32) -> (i32, i32) {
    %c0_i32 = arith.constant 0 : i32
    %c0_i32_0 = arith.constant 0 : i32
    %c0_i32_1 = arith.constant 0 : i32
    return %c0_i32, %c0_i32_0 : i32, i32
  }
  func.func @transform_3(%arg0: i32) -> (i32, i32) {
    %c0_i32 = arith.constant 0 : i32
    %c0_i32_0 = arith.constant 0 : i32
    %c0_i32_1 = arith.constant 0 : i32
    return %c0_i32, %c0_i32_0 : i32, i32
  }
  func.func @transform_4(%arg0: i32) -> (i32, i32, i32) {
    %c0_i32 = arith.constant 0 : i32
    %c0_i32_0 = arith.constant 0 : i32
    %c0_i32_1 = arith.constant 0 : i32
    %c0_i32_2 = arith.constant 0 : i32
    return %c0_i32, %c0_i32_0, %c0_i32_1 : i32, i32, i32
  }
  func.func @transform_5(%arg0: i32) -> (i32, i32, i32) {
    %c0_i32 = arith.constant 0 : i32
    %c0_i32_0 = arith.constant 0 : i32
    %c0_i32_1 = arith.constant 0 : i32
    %c0_i32_2 = arith.constant 0 : i32
    return %c0_i32, %c0_i32_0, %c0_i32_1 : i32, i32, i32
  }
  func.func @transform_6(%arg0: i32) -> (i32, i32, i32) {
    %c0_i32 = arith.constant 0 : i32
    %c0_i32_0 = arith.constant 0 : i32
    %c0_i32_1 = arith.constant 0 : i32
    return %arg0, %c0_i32, %c0_i32_0 : i32, i32, i32
  }
}

</mosaic_0001>

<llo_original>
// kernel: tpu_custom_call.1
$region0: #{tpu_custom_call.1}
  #allocation0 [shape = 'u32[]', space=smem, size = 0x4, offset = 0x4, fixed_abs, tag = 'smem constant byte address 0x4 - core index']
  #allocation1 [shape = 'u32[144,128]{1,0:T(1,128)}', space=vmem, size = 0x12000, scoped, tag = 'internal scratch']
  %s0 = inlined_call_operand.hbm [shape: f32[2,8,256], index: 0, kind: input, shape index: {}]
  %s1 = inlined_call_operand.vmem [shape: f32[8,72], index: 1, kind: input, shape index: {}]
  %s2 = inlined_call_operand.vmem [shape: f32[8,72], index: 2, kind: input, shape index: {}]
  %s3 = inlined_call_operand.hbm [shape: f32[8,8], index: 3, kind: input, shape index: {}]
  %s4 = inlined_call_operand.vmem [shape: f32[9,1,256], index: 4, kind: input, shape index: {}]
  %s5 = inlined_call_operand.vmem [shape: f32[3,8,1], index: 5, kind: input, shape index: {}]
  %s6 = inlined_call_operand.hbm [shape: f32[2,8,256], index: 6, kind: output, shape index: {}]
  %s7 = sld [smem:[#allocation0]]
  $region65: #{tpu_custom_call.1} parent=0
    _
  %s9 = ssub.s32 1, %s7
  %s10 = scalar_select 0, %s9, %s7
  $region1: #{tpu_custom_call.1} parent=0
    #allocation2 [shape = 'u8[16384]{0}', space=vmem, size = 0x4000, scoped, tag = 'input window, operand 0']
    #allocation3 [shape = 's32[2]{0}', space=sflag, size = 0x8, scoped, tag = 'scoped memory for tpu_custom_call.1']
    #allocation4 [shape = 's32[2]{0}', space=sflag, size = 0x8, scoped, tag = 'scoped memory for tpu_custom_call.1']
    #allocation5 [shape = 'u8[4096]{0}', space=vmem, size = 0x1000, scoped, tag = 'input window, operand 3, single buffered']
    #allocation6 [shape = 's32[1]{0}', space=sflag, size = 0x4, scoped, tag = 'scoped memory for tpu_custom_call.1']
    #allocation7 [shape = 'u8[16384]{0}', space=vmem, size = 0x4000, scoped, tag = 'output window, operand 0']
    %11 = vsyncpa [#allocation3], 0
    %s12 = scalar_lea.sflag [#allocation3], 1
    %13 = vsyncpa %s12, 0
    %14 = vsyncpa [#allocation6], 0
    %15 = vsyncpa [#allocation4], 0
    %s16 = scalar_lea.sflag [#allocation4], 1
    %17 = vsyncpa %s16, 0
    loop: start=0, step=1, limit=4
    $region2: #{tpu_custom_call.1} parent=1 // loop_pre_header
      _
    $region3: #{tpu_custom_call.1} parent=1 // loop_header
      %s19 = sphi 0, %s23
      %p20 = scmp.ge.s32.totalorder %s19, 4
      %s29 = sphi 0, %s31
      %s32 = sphi 0, %s29
      %s33 = sphi 0, %s32
      %s49 = sphi 0, %s33
      %s53 = sphi 0, %s53
      %s55 = sphi 0, %s53
      %s56 = sphi 0, %s55
      %s70 = sphi 0, %s56
      %s74 = sphi 0, %s74
      %s76 = sphi 0, %s74
      %s77 = sphi 0, %s76
      %s91 = sphi 0, %s77
      %s95 = sphi 0, %s95
      %s97 = sphi 0, %s95
      %s98 = sphi 0, %s97
      %s112 = sphi 0, %s98
      %s116 = sphi 0, %s116
      %s118 = sphi 0, %s116
      %s119 = sphi 0, %s118
      %s133 = sphi 0, %s119
      %s137 = sphi 0, %s137
      %s139 = sphi 0, %s137
      %s140 = sphi 0, %s139
      %s154 = sphi 0, %s140
      %s160 = sphi 0, %s162
      %s163 = sphi 0, %s160
      %s164 = sphi 0, %s163
      %s180 = sphi 0, %s164
    $region4: #{tpu_custom_call.1} parent=1 // loop_header_branch
      %22 = sbr.rel (%p20) target = $region8
    $region5: #{tpu_custom_call.1} parent=1 // loop_body
      %s24 = ssub.s32 %s19, 1
      %s25 = ssub.s32 %s19, 2
      %s26 = sadd.s32 %s19, 1
      %s27 = ssub.s32 %s19, %s26
      %p28 = scmp.eq.s32.totalorder %s27, 0
      %s30 = sadd.s32 %s29, 1
      %s31 = scalar_select %p28, %s29, %s30
      %p34 = pneg %p28
      %p35 = scmp.eq.s32.totalorder %s19, 1
      %p36 = por %p34, %p35
      %p37 = scmp.ne.s32.totalorder %s29, %s32
      %p38 = scmp.eq.s32.totalorder %s19, 0
      %p39 = por %p37, %p38
      %p40 = scmp.ne.s32.totalorder %s29, %s32
      %p41 = scmp.eq.s32.totalorder %s24, 1
      %p42 = por %p40, %p41
      %p43 = scmp.ne.s32.totalorder %s32, %s33
      %p44 = scmp.eq.s32.totalorder %s24, 0
      %p45 = por %p43, %p44
      %p46 = scmp.ne.s32.totalorder %s32, %s33
      %p47 = scmp.eq.s32.totalorder %s25, 1
      %p48 = por %p46, %p47
      %p50 = scmp.ne.s32.totalorder %s33, %s49
      %p51 = scmp.eq.s32.totalorder %s25, 0
      %p52 = por %p50, %p51
      %s54 = sadd.s32 %s53, 1
      %p57 = scmp.eq.s32.totalorder %s19, 1
      %p58 = scmp.ne.s32.totalorder %s53, %s55
      %p59 = scmp.eq.s32.totalorder %s19, 0
      %p60 = por %p58, %p59
      %p61 = scmp.ne.s32.totalorder %s53, %s55
      %p62 = scmp.eq.s32.totalorder %s24, 1
      %p63 = por %p61, %p62
      %p64 = scmp.ne.s32.totalorder %s55, %s56
      %p65 = scmp.eq.s32.totalorder %s24, 0
      %p66 = por %p64, %p65
      %p67 = scmp.ne.s32.totalorder %s55, %s56
      %p68 = scmp.eq.s32.totalorder %s25, 1
      %p69 = por %p67, %p68
      %p71 = scmp.ne.s32.totalorder %s56, %s70
      %p72 = scmp.eq.s32.totalorder %s25, 0
      %p73 = por %p71, %p72
      %s75 = sadd.s32 %s74, 1
      %p78 = scmp.eq.s32.totalorder %s19, 1
      %p79 = scmp.ne.s32.totalorder %s74, %s76
      %p80 = scmp.eq.s32.totalorder %s19, 0
      %p81 = por %p79, %p80
      %p82 = scmp.ne.s32.totalorder %s74, %s76
      %p83 = scmp.eq.s32.totalorder %s24, 1
      %p84 = por %p82, %p83
      %p85 = scmp.ne.s32.totalorder %s76, %s77
      %p86 = scmp.eq.s32.totalorder %s24, 0
      %p87 = por %p85, %p86
      %p88 = scmp.ne.s32.totalorder %s76, %s77
      %p89 = scmp.eq.s32.totalorder %s25, 1
      %p90 = por %p88, %p89
      %p92 = scmp.ne.s32.totalorder %s77, %s91
      %p93 = scmp.eq.s32.totalorder %s25, 0
      %p94 = por %p92, %p93
      %s96 = sadd.s32 %s95, 1
      %p99 = scmp.eq.s32.totalorder %s19, 1
      %p100 = scmp.ne.s32.totalorder %s95, %s97
      %p101 = scmp.eq.s32.totalorder %s19, 0
      %p102 = por %p100, %p101
      %p103 = scmp.ne.s32.totalorder %s95, %s97
      %p104 = scmp.eq.s32.totalorder %s24, 1
      %p105 = por %p103, %p104
      %p106 = scmp.ne.s32.totalorder %s97, %s98
      %p107 = scmp.eq.s32.totalorder %s24, 0
      %p108 = por %p106, %p107
      %p109 = scmp.ne.s32.totalorder %s97, %s98
      %p110 = scmp.eq.s32.totalorder %s25, 1
      %p111 = por %p109, %p110
      %p113 = scmp.ne.s32.totalorder %s98, %s112
      %p114 = scmp.eq.s32.totalorder %s25, 0
      %p115 = por %p113, %p114
      %s117 = sadd.s32 %s116, 1
      %p120 = scmp.eq.s32.totalorder %s19, 1
      %p121 = scmp.ne.s32.totalorder %s116, %s118
      %p122 = scmp.eq.s32.totalorder %s19, 0
      %p123 = por %p121, %p122
      %p124 = scmp.ne.s32.totalorder %s116, %s118
      %p125 = scmp.eq.s32.totalorder %s24, 1
      %p126 = por %p124, %p125
      %p127 = scmp.ne.s32.totalorder %s118, %s119
      %p128 = scmp.eq.s32.totalorder %s24, 0
      %p129 = por %p127, %p128
      %p130 = scmp.ne.s32.totalorder %s118, %s119
      %p131 = scmp.eq.s32.totalorder %s25, 1
      %p132 = por %p130, %p131
      %p134 = scmp.ne.s32.totalorder %s119, %s133
      %p135 = scmp.eq.s32.totalorder %s25, 0
      %p136 = por %p134, %p135
      %s138 = sadd.s32 %s137, 1
      %p141 = scmp.eq.s32.totalorder %s19, 1
      %p142 = scmp.ne.s32.totalorder %s137, %s139
      %p143 = scmp.eq.s32.totalorder %s19, 0
      %p144 = por %p142, %p143
      %p145 = scmp.ne.s32.totalorder %s137, %s139
      %p146 = scmp.eq.s32.totalorder %s24, 1
      %p147 = por %p145, %p146
      %p148 = scmp.ne.s32.totalorder %s139, %s140
      %p149 = scmp.eq.s32.totalorder %s24, 0
      %p150 = por %p148, %p149
      %p151 = scmp.ne.s32.totalorder %s139, %s140
      %p152 = scmp.eq.s32.totalorder %s25, 1
      %p153 = por %p151, %p152
      %p155 = scmp.ne.s32.totalorder %s140, %s154
      %p156 = scmp.eq.s32.totalorder %s25, 0
      %p157 = por %p155, %p156
      %s158 = ssub.s32 %s19, %s26
      %p159 = scmp.eq.s32.totalorder %s158, 0
      %s161 = sadd.s32 %s160, 1
      %s162 = scalar_select %p159, %s160, %s161
      %p165 = pneg %p159
      %p166 = scmp.eq.s32.totalorder %s19, 1
      %p167 = por %p165, %p166
      %p168 = scmp.ne.s32.totalorder %s160, %s163
      %p169 = scmp.eq.s32.totalorder %s19, 0
      %p170 = por %p168, %p169
      %p171 = scmp.ne.s32.totalorder %s160, %s163
      %p172 = scmp.eq.s32.totalorder %s24, 1
      %p173 = por %p171, %p172
      %p174 = scmp.ne.s32.totalorder %s163, %s164
      %p175 = scmp.eq.s32.totalorder %s24, 0
      %p176 = por %p174, %p175
      %p177 = scmp.ne.s32.totalorder %s163, %s164
      %p178 = scmp.eq.s32.totalorder %s25, 1
      %p179 = por %p177, %p178
      %p181 = scmp.ne.s32.totalorder %s164, %s180
      %p182 = scmp.eq.s32.totalorder %s25, 0
      %p183 = por %p181, %p182
      %p184 = scmp.le.s32.totalorder 1, %s19
      %p185 = scmp.lt.s32.totalorder %s19, 3
      %p186 = pnand %p184, %p185
      %p187 = pneg %p186
      // Predicated region
      $region9: #{tpu_custom_call.1} parent=5 // pred_check
        _
      $region10: #{tpu_custom_call.1} parent=5 // pred_check_branch
        %189 = sbr.rel (%p186) target = $region12
      $region11: #{tpu_custom_call.1} parent=5 // pred_region
        %s190 = ssub.s32 %s19, 1
        // Predicated region
        $region13: #{tpu_custom_call.1} parent=11 // pred_check
          %p191 = pneg %p66
        $region14: #{tpu_custom_call.1} parent=11 // pred_check_branch
          %193 = sbr.rel (%p191) target = $region16
        $region15: #{tpu_custom_call.1} parent=11 // pred_region
          _
        $region16: #{tpu_custom_call.1} parent=11 // pred_fallthru
          _
        // Predicated region
        $region17: #{tpu_custom_call.1} parent=11 // pred_check
          %p194 = pneg %p87
        $region18: #{tpu_custom_call.1} parent=11 // pred_check_branch
          %196 = sbr.rel (%p194) target = $region20
        $region19: #{tpu_custom_call.1} parent=11 // pred_region
          _
        $region20: #{tpu_custom_call.1} parent=11 // pred_fallthru
          _
        // Predicated region
        $region21: #{tpu_custom_call.1} parent=11 // pred_check
          %p197 = pneg %p108
        $region22: #{tpu_custom_call.1} parent=11 // pred_check_branch
          %199 = sbr.rel (%p197) target = $region24
        $region23: #{tpu_custom_call.1} parent=11 // pred_region
          %s201 = ssub.s32 128, 128
          %202 = vsyncadd [#allocation6], %s201
          %s204 = sshll.u32 [#allocation5], 4
          %s205 = int_to_ptr.vmem [resolvable:$true] %s204
          %207 = dma.hbm_to_vmem [thread:$0]  %s3, 128, %s205, [#allocation6]
        $region24: #{tpu_custom_call.1} parent=11 // pred_fallthru
          _
        // Predicated region
        $region25: #{tpu_custom_call.1} parent=11 // pred_check
          %p208 = pneg %p129
        $region26: #{tpu_custom_call.1} parent=11 // pred_check_branch
          %210 = sbr.rel (%p208) target = $region28
        $region27: #{tpu_custom_call.1} parent=11 // pred_region
          _
        $region28: #{tpu_custom_call.1} parent=11 // pred_fallthru
          _
        // Predicated region
        $region29: #{tpu_custom_call.1} parent=11 // pred_check
          %p211 = pneg %p150
        $region30: #{tpu_custom_call.1} parent=11 // pred_check_branch
          %213 = sbr.rel (%p211) target = $region32
        $region31: #{tpu_custom_call.1} parent=11 // pred_region
          _
        $region32: #{tpu_custom_call.1} parent=11 // pred_fallthru
          _
      $region12: #{tpu_custom_call.1} parent=5 // pred_fallthru
        _
      %p214 = scmp.lt.s32.totalorder %s19, 2
      // Predicated region
      $region33: #{tpu_custom_call.1} parent=5 // pred_check
        %p215 = pneg %p214
      $region34: #{tpu_custom_call.1} parent=5 // pred_check_branch
        %217 = sbr.rel (%p215) target = $region36
      $region35: #{tpu_custom_call.1} parent=5 // pred_region
        // Predicated region
        $region37: #{tpu_custom_call.1} parent=35 // pred_check
          %p218 = pneg %p39
        $region38: #{tpu_custom_call.1} parent=35 // pred_check_branch
          %220 = sbr.rel (%p218) target = $region40
        $region39: #{tpu_custom_call.1} parent=35 // pred_region
          %s221 = sand.u32 %s29, 1
          %s222 = scalar_lea.sflag [#allocation3], %s221
          %s223 = sand.u32 %s29, 1
          %s224 = smul.addr %s223, 16
          %s225 = scalar_lea.vmem [#allocation2], %s224
          %s227 = ssub.s32 256, 256
          %228 = vsyncadd %s222, %s227
          %s229 = smul.addr %s19, 2
          %s230 = smul.addr %s229, 128
          %s231 = scalar_lea.hbm %s0, %s230
          %s233 = sshll.u32 %s225, 4
          %s234 = int_to_ptr.vmem [resolvable:$true] %s233
          %236 = dma.hbm_to_vmem [thread:$0]  %s231, 256, %s234, %s222
        $region40: #{tpu_custom_call.1} parent=35 // pred_fallthru
          _
      $region36: #{tpu_custom_call.1} parent=5 // pred_fallthru
        _
      %p237 = scmp.le.s32.totalorder 1, %s19
      %p238 = scmp.lt.s32.totalorder %s19, 3
      %p239 = pnand %p237, %p238
      %p240 = pneg %p239
      // Predicated region
      $region41: #{tpu_custom_call.1} parent=5 // pred_check
        _
      $region42: #{tpu_custom_call.1} parent=5 // pred_check_branch
        %242 = sbr.rel (%p239) target = $region44
      $region43: #{tpu_custom_call.1} parent=5 // pred_region
        %s243 = ssub.s32 %s19, 1
        %s244 = sand.u32 %s32, 1
        %s245 = scalar_lea.sflag [#allocation3], %s244
        %s246 = sand.u32 %s32, 1
        %s247 = smul.addr %s246, 16
        %s248 = scalar_lea.vmem [#allocation2], %s247
        // Predicated region
        $region45: #{tpu_custom_call.1} parent=43 // pred_check
          %p249 = pneg %p45
        $region46: #{tpu_custom_call.1} parent=43 // pred_check_branch
          %251 = sbr.rel (%p249) target = $region48
        $region47: #{tpu_custom_call.1} parent=43 // pred_region
          %252 = dma.done %s245, 256
        $region48: #{tpu_custom_call.1} parent=43 // pred_fallthru
          _
        // Predicated region
        $region49: #{tpu_custom_call.1} parent=43 // pred_check
          %p253 = pneg %p108
        $region50: #{tpu_custom_call.1} parent=43 // pred_check_branch
          %255 = sbr.rel (%p253) target = $region52
        $region51: #{tpu_custom_call.1} parent=43 // pred_region
          %256 = dma.done [#allocation6], 128
        $region52: #{tpu_custom_call.1} parent=43 // pred_fallthru
          _
        %s257 = sand.u32 %s32, 1
        %s258 = scalar_lea.sflag [#allocation3], %s257
        %s259 = sand.u32 %s32, 1
        %s260 = smul.addr %s259, 16
        %s261 = scalar_lea.vmem [#allocation2], %s260
        %p262 = pneg %p45
        %p263 = pneg %p42
        %p264 = pneg %p66
        %p265 = pneg %p63
        %p266 = pneg %p87
        %p267 = pneg %p84
        %p268 = pneg %p108
        %p269 = pneg %p105
        %p270 = pneg %p129
        %p271 = pneg %p126
        %p272 = pneg %p150
        %p273 = pneg %p147
        %p274 = pneg %p176
        %p275 = pneg %p173
        %s276 = sand.u32 %s163, 1
        %s277 = scalar_lea.sflag [#allocation4], %s276
        %s278 = sand.u32 %s163, 1
        %s279 = smul.addr %s278, 16
        %s280 = scalar_lea.vmem [#allocation7], %s279
        %v281 = vld [vmem:[%s248] sm:$0xff]
        %v282 = vld [vmem:[%s248 + $0x8] sm:$0xff]
        %v283 = vld [vmem:[%s1] sm:$0xff]
        %284 = vrot.lane.b32.xlu0 %v281, 17
        %v285 = vpop.permute.xlu0 %284
        %286 = vrot.lane.b32.xlu0 %v282, 17
        %v287 = vpop.permute.xlu0 %286
        %v288 = vlaneseq
        %v289 = vand.u32 %v288, 127
        %vm290 = vcmp.lt.s32.totalorder %v289, 17
        %v291 = vsel %vm290, %v285, %v287
        %v292 = vsel %vm290, %v287, %v285
        %v293 = vld [vmem:[%s4] sm:$0x3]
        %v295 = vlaneseq
        %v296 = vshrl.u32 %v295, 7
        %v297 = vsub.s32 0, %v296
        %v298 = vrot.slane %v293, %v297
        %v299 = vlaneseq
        %v300 = vshrl.u32 %v299, 7
        %v301 = vsub.s32 1, %v300
        %v302 = vrot.slane %v293, %v301
        %v305 = vmul.f32 %v292, %v298
        %v306 = vmul.f32 %v291, %v302
        %307 = vrot.lane.b32.xlu0 %v281, 16
        %v308 = vpop.permute.xlu0 %307
        %309 = vrot.lane.b32.xlu0 %v282, 16
        %v310 = vpop.permute.xlu0 %309
        %vm311 = vcmp.lt.s32.totalorder %v289, 16
        %v312 = vsel %vm311, %v308, %v310
        %v313 = vsel %vm311, %v310, %v308
        %s314 = scalar_lea.vmem %s4, 2
        %v315 = vld [vmem:[%s314] sm:$0x3]
        %v317 = vlaneseq
        %v318 = vshrl.u32 %v317, 7
        %v319 = vsub.s32 0, %v318
        %v320 = vrot.slane %v315, %v319
        %v321 = vlaneseq
        %v322 = vshrl.u32 %v321, 7
        %v323 = vsub.s32 1, %v322
        %v324 = vrot.slane %v315, %v323
        %v327 = vmul.f32 %v313, %v320
        %v328 = vmul.f32 %v312, %v324
        %329 = vrot.lane.b32.xlu0 %v281, 15
        %v330 = vpop.permute.xlu0 %329
        %331 = vrot.lane.b32.xlu0 %v282, 15
        %v332 = vpop.permute.xlu0 %331
        %vm333 = vcmp.lt.s32.totalorder %v289, 15
        %v334 = vsel %vm333, %v330, %v332
        %v335 = vsel %vm333, %v332, %v330
        %s336 = scalar_lea.vmem %s4, 4
        %v337 = vld [vmem:[%s336] sm:$0x3]
        %v339 = vlaneseq
        %v340 = vshrl.u32 %v339, 7
        %v341 = vsub.s32 0, %v340
        %v342 = vrot.slane %v337, %v341
        %v343 = vlaneseq
        %v344 = vshrl.u32 %v343, 7
        %v345 = vsub.s32 1, %v344
        %v346 = vrot.slane %v337, %v345
        %v349 = vmul.f32 %v335, %v342
        %v350 = vmul.f32 %v334, %v346
        %351 = vrot.lane.b32.xlu0 %v281, 1
        %v352 = vpop.permute.xlu0 %351
        %353 = vrot.lane.b32.xlu0 %v282, 1
        %v354 = vpop.permute.xlu0 %353
        %vm355 = vcmp.lt.s32.totalorder %v289, 1
        %v356 = vsel %vm355, %v352, %v354
        %v357 = vsel %vm355, %v354, %v352
        %s358 = scalar_lea.vmem %s4, 6
        %v359 = vld [vmem:[%s358] sm:$0x3]
        %v361 = vlaneseq
        %v362 = vshrl.u32 %v361, 7
        %v363 = vsub.s32 0, %v362
        %v364 = vrot.slane %v359, %v363
        %v365 = vlaneseq
        %v366 = vshrl.u32 %v365, 7
        %v367 = vsub.s32 1, %v366
        %v368 = vrot.slane %v359, %v367
        %v371 = vmul.f32 %v357, %v364
        %v372 = vmul.f32 %v356, %v368
        %s373 = scalar_lea.vmem %s4, 8
        %v374 = vld [vmem:[%s373] sm:$0x3]
        %v376 = vlaneseq
        %v377 = vshrl.u32 %v376, 7
        %v378 = vsub.s32 0, %v377
        %v379 = vrot.slane %v374, %v378
        %v380 = vlaneseq
        %v381 = vshrl.u32 %v380, 7
        %v382 = vsub.s32 1, %v381
        %v383 = vrot.slane %v374, %v382
        %v386 = vmul.f32 %v281, %v379
        %v387 = vmul.f32 %v282, %v383
        %388 = vrot.lane.b32.xlu0 %v281, 127
        %v389 = vpop.permute.xlu0 %388
        %390 = vrot.lane.b32.xlu0 %v282, 127
        %v391 = vpop.permute.xlu0 %390
        %vm392 = vcmp.lt.s32.totalorder %v289, 127
        %v393 = vsel %vm392, %v389, %v391
        %v394 = vsel %vm392, %v391, %v389
        %s395 = scalar_lea.vmem %s4, 10
        %v396 = vld [vmem:[%s395] sm:$0x3]
        %v398 = vlaneseq
        %v399 = vshrl.u32 %v398, 7
        %v400 = vsub.s32 0, %v399
        %v401 = vrot.slane %v396, %v400
        %v402 = vlaneseq
        %v403 = vshrl.u32 %v402, 7
        %v404 = vsub.s32 1, %v403
        %v405 = vrot.slane %v396, %v404
        %v408 = vmul.f32 %v393, %v401
        %v409 = vmul.f32 %v394, %v405
        %410 = vrot.lane.b32.xlu0 %v281, 113
        %v411 = vpop.permute.xlu0 %410
        %412 = vrot.lane.b32.xlu0 %v282, 113
        %v413 = vpop.permute.xlu0 %412
        %vm414 = vcmp.lt.s32.totalorder %v289, 113
        %v415 = vsel %vm414, %v411, %v413
        %v416 = vsel %vm414, %v413, %v411
        %s417 = scalar_lea.vmem %s4, 12
        %v418 = vld [vmem:[%s417] sm:$0x3]
        %v420 = vlaneseq
        %v421 = vshrl.u32 %v420, 7
        %v422 = vsub.s32 0, %v421
        %v423 = vrot.slane %v418, %v422
        %v424 = vlaneseq
        %v425 = vshrl.u32 %v424, 7
        %v426 = vsub.s32 1, %v425
        %v427 = vrot.slane %v418, %v426
        %v430 = vmul.f32 %v415, %v423
        %v431 = vmul.f32 %v416, %v427
        %432 = vrot.lane.b32.xlu0 %v281, 112
        %v433 = vpop.permute.xlu0 %432
        %434 = vrot.lane.b32.xlu0 %v282, 112
        %v435 = vpop.permute.xlu0 %434
        %vm436 = vcmp.lt.s32.totalorder %v289, 112
        %v437 = vsel %vm436, %v433, %v435
        %v438 = vsel %vm436, %v435, %v433
        %s439 = scalar_lea.vmem %s4, 14
        %v440 = vld [vmem:[%s439] sm:$0x3]
        %v442 = vlaneseq
        %v443 = vshrl.u32 %v442, 7
        %v444 = vsub.s32 0, %v443
        %v445 = vrot.slane %v440, %v444
        %v446 = vlaneseq
        %v447 = vshrl.u32 %v446, 7
        %v448 = vsub.s32 1, %v447
        %v449 = vrot.slane %v440, %v448
        %v452 = vmul.f32 %v437, %v445
        %v453 = vmul.f32 %v438, %v449
        %454 = vrot.lane.b32.xlu0 %v281, 111
        %v455 = vpop.permute.xlu0 %454
        %456 = vrot.lane.b32.xlu0 %v282, 111
        %v457 = vpop.permute.xlu0 %456
        %vm458 = vcmp.lt.s32.totalorder %v289, 111
        %v459 = vsel %vm458, %v455, %v457
        %v460 = vsel %vm458, %v457, %v455
        %s461 = scalar_lea.vmem %s4, 16
        %v462 = vld [vmem:[%s461] sm:$0x3]
        %v464 = vlaneseq
        %v465 = vshrl.u32 %v464, 7
        %v466 = vsub.s32 0, %v465
        %v467 = vrot.slane %v462, %v466
        %v468 = vlaneseq
        %v469 = vshrl.u32 %v468, 7
        %v470 = vsub.s32 1, %v469
        %v471 = vrot.slane %v462, %v470
        %v474 = vmul.f32 %v459, %v467
        %v475 = vmul.f32 %v460, %v471
        %v476 = vld [vmem:[%s5] sm:$0xff]
        %478 = vset.pattern.permute.xlu0 0
        %479 = vperm.xlu0 %478, %v476
        %v480 = vpop.permute.xlu0 %479
        %vm482 = vcmask 588800
        %v484 = vsel %vm482, %v283, 0
        %486 = vmatprep.subr.mxu0 0.0
        %487 = vmatpush1.msra.mxu0 0.0
        %488 = vmatprep.subr.mxu0 0.0
        %489 = vmatpush1.msra.mxu0 0.0
        %490 = vmatprep.subr.mxu0 0.0
        %491 = vmatpush1.msra.mxu0 0.0
        %492 = vmatprep.subr.mxu0 0.0
        %493 = vmatpush1.msra.mxu0 0.0
        %494 = vmatprep.subr.mxu0 0.0
        %495 = vmatpush1.msra.mxu0 0.0
        %496 = vmatprep.subr.mxu0 0.0
        %497 = vmatpush1.msra.mxu0 0.0
        %498 = vmatprep.subr.mxu0 0.0
        %499 = vmatpush1.msra.mxu0 0.0
        %500 = vmatprep.subr.mxu0 %v475
        %501 = vmatpush1.msra.mxu0 %v474
        %502 = vmatprep.subr.mxu0 %v453
        %503 = vmatpush1.msra.mxu0 %v452
        %504 = vmatprep.subr.mxu0 %v431
        %505 = vmatpush1.msra.mxu0 %v430
        %506 = vmatprep.subr.mxu0 %v409
        %507 = vmatpush1.msra.mxu0 %v408
        %508 = vmatprep.subr.mxu0 %v387
        %509 = vmatpush1.msra.mxu0 %v386
        %510 = vmatprep.subr.mxu0 %v372
        %511 = vmatpush1.msra.mxu0 %v371
        %512 = vmatprep.subr.mxu0 %v350
        %513 = vmatpush1.msra.mxu0 %v349
        %514 = vmatprep.subr.mxu0 %v328
        %515 = vmatpush1.msra.mxu0 %v327
        %516 = vmatprep.subr.mxu0 %v306
        %517 = vmatpush1.msra.mxu0 %v305
        %518 = vmatprep.subr.mxu0 0.0
        %519 = vmatpush2.msra.mxu0 0.0
        %520 = vmatprep.subr.mxu0 0.0
        %521 = vmatpush2.msra.mxu0 0.0
        %522 = vmatprep.subr.mxu0 0.0
        %523 = vmatpush2.msra.mxu0 0.0
        %524 = vmatprep.subr.mxu0 0.0
        %525 = vmatpush2.msra.mxu0 0.0
        %526 = vmatprep.subr.mxu0 0.0
        %527 = vmatpush2.msra.mxu0 0.0
        %528 = vmatprep.subr.mxu0 0.0
        %529 = vmatpush2.msra.mxu0 0.0
        %530 = vmatprep.subr.mxu0 0.0
        %531 = vmatpush2.msra.mxu0 0.0
        %532 = vmatprep.subr.mxu0 0.0
        %533 = vmatpush2.msra.mxu0 0.0
        %534 = vmatprep.subr.mxu0 0.0
        %535 = vmatpush2.msra.mxu0 0.0
        %536 = vmatprep.subr.mxu0 0.0
        %537 = vmatpush2.msra.mxu0 0.0
        %538 = vmatprep.subr.mxu0 0.0
        %539 = vmatpush2.msra.mxu0 0.0
        %540 = vmatprep.subr.mxu0 0.0
        %541 = vmatpush2.msra.mxu0 0.0
        %542 = vmatprep.subr.mxu0 0.0
        %543 = vmatpush2.msra.mxu0 0.0
        %544 = vmatprep.subr.mxu0 0.0
        %545 = vmatpush2.msra.mxu0 0.0
        %546 = vmatprep.subr.mxu0 0.0
        %547 = vmatpush2.msra.mxu0 0.0
        %548 = vmatprep.subr.mxu0 0.0
        %549 = vmatpush2.msra.mxu0 0.0
        %550 = vmatprep.mubr.f32.mxu0 0.0
        %551 = vmatmul.mubr.f32.gmra.mxu0 %v484
        %v552 = vpop.f32.mrf.mxu0
        %v553 = vadd.f32 %v480, %v552
        %v554 = vpop.f32.mrf.mxu0
        %v555 = vadd.f32 %v480, %v554
        %556 = vdwg.mxu0
        %vm557 = vcmp.gt.f32.partialorder %v553, 0.0
        %vm558 = vcmp.gt.f32.partialorder %v555, 0.0
        %v559 = vmul.f32 %v553, 0.2
        %v560 = vmul.f32 %v555, 0.2
        %v561 = vsel %vm557, %v553, %v559
        %v562 = vsel %vm558, %v555, %v560
        %v563 = vld [vmem:[%s2] sm:$0xff]
        %564 = vrot.lane.b32.xlu0 %v561, 17
        %v565 = vpop.permute.xlu0 %564
        %566 = vrot.lane.b32.xlu0 %v562, 17
        %v567 = vpop.permute.xlu0 %566
        %v568 = vsel %vm290, %v565, %v567
        %v569 = vsel %vm290, %v567, %v565
        %v570 = vmul.f32 %v569, %v298
        %v571 = vmul.f32 %v568, %v302
        %572 = vrot.lane.b32.xlu0 %v561, 16
        %v573 = vpop.permute.xlu0 %572
        %574 = vrot.lane.b32.xlu0 %v562, 16
        %v575 = vpop.permute.xlu0 %574
        %v576 = vsel %vm311, %v573, %v575
        %v577 = vsel %vm311, %v575, %v573
        %v578 = vmul.f32 %v577, %v320
        %v579 = vmul.f32 %v576, %v324
        %580 = vrot.lane.b32.xlu0 %v561, 15
        %v581 = vpop.permute.xlu0 %580
        %582 = vrot.lane.b32.xlu0 %v562, 15
        %v583 = vpop.permute.xlu0 %582
        %v584 = vsel %vm333, %v581, %v583
        %v585 = vsel %vm333, %v583, %v581
        %v586 = vmul.f32 %v585, %v342
        %v587 = vmul.f32 %v584, %v346
        %588 = vrot.lane.b32.xlu0 %v561, 1
        %v589 = vpop.permute.xlu0 %588
        %590 = vrot.lane.b32.xlu0 %v562, 1
        %v591 = vpop.permute.xlu0 %590
        %v592 = vsel %vm355, %v589, %v591
        %v593 = vsel %vm355, %v591, %v589
        %v594 = vmul.f32 %v593, %v364
        %v595 = vmul.f32 %v592, %v368
        %v596 = vmul.f32 %v561, %v379
        %v597 = vmul.f32 %v562, %v383
        %598 = vrot.lane.b32.xlu0 %v561, 127
        %v599 = vpop.permute.xlu0 %598
        %600 = vrot.lane.b32.xlu0 %v562, 127
        %v601 = vpop.permute.xlu0 %600
        %v602 = vsel %vm392, %v599, %v601
        %v603 = vsel %vm392, %v601, %v599
        %v604 = vmul.f32 %v602, %v401
        %v605 = vmul.f32 %v603, %v405
        %606 = vrot.lane.b32.xlu0 %v561, 113
        %v607 = vpop.permute.xlu0 %606
        %608 = vrot.lane.b32.xlu0 %v562, 113
        %v609 = vpop.permute.xlu0 %608
        %v610 = vsel %vm414, %v607, %v609
        %v611 = vsel %vm414, %v609, %v607
        %v612 = vmul.f32 %v610, %v423
        %v613 = vmul.f32 %v611, %v427
        %614 = vrot.lane.b32.xlu0 %v561, 112
        %v615 = vpop.permute.xlu0 %614
        %616 = vrot.lane.b32.xlu0 %v562, 112
        %v617 = vpop.permute.xlu0 %616
        %v618 = vsel %vm436, %v615, %v617
        %v619 = vsel %vm436, %v617, %v615
        %v620 = vmul.f32 %v618, %v445
        %v621 = vmul.f32 %v619, %v449
        %622 = vrot.lane.b32.xlu0 %v561, 111
        %v623 = vpop.permute.xlu0 %622
        %624 = vrot.lane.b32.xlu0 %v562, 111
        %v625 = vpop.permute.xlu0 %624
        %v626 = vsel %vm458, %v623, %v625
        %v627 = vsel %vm458, %v625, %v623
        %v628 = vmul.f32 %v626, %v467
        %v629 = vmul.f32 %v627, %v471
        %s630 = scalar_lea.vmem %s5, 8
        %v631 = vld [vmem:[%s630] sm:$0xff]
        %633 = vset.pattern.permute.xlu0 0
        %634 = vperm.xlu0 %633, %v631
        %v635 = vpop.permute.xlu0 %634
        %v638 = vsel %vm482, %v563, 0
        %640 = vmatprep.subr.mxu0 0.0
        %641 = vmatpush1.msra.mxu0 0.0
        %642 = vmatprep.subr.mxu0 0.0
        %643 = vmatpush1.msra.mxu0 0.0
        %644 = vmatprep.subr.mxu0 0.0
        %645 = vmatpush1.msra.mxu0 0.0
        %646 = vmatprep.subr.mxu0 0.0
        %647 = vmatpush1.msra.mxu0 0.0
        %648 = vmatprep.subr.mxu0 0.0
        %649 = vmatpush1.msra.mxu0 0.0
        %650 = vmatprep.subr.mxu0 0.0
        %651 = vmatpush1.msra.mxu0 0.0
        %652 = vmatprep.subr.mxu0 0.0
        %653 = vmatpush1.msra.mxu0 0.0
        %654 = vmatprep.subr.mxu0 %v629
        %655 = vmatpush1.msra.mxu0 %v628
        %656 = vmatprep.subr.mxu0 %v621
        %657 = vmatpush1.msra.mxu0 %v620
        %658 = vmatprep.subr.mxu0 %v613
        %659 = vmatpush1.msra.mxu0 %v612
        %660 = vmatprep.subr.mxu0 %v605
        %661 = vmatpush1.msra.mxu0 %v604
        %662 = vmatprep.subr.mxu0 %v597
        %663 = vmatpush1.msra.mxu0 %v596
        %664 = vmatprep.subr.mxu0 %v595
        %665 = vmatpush1.msra.mxu0 %v594
        %666 = vmatprep.subr.mxu0 %v587
        %667 = vmatpush1.msra.mxu0 %v586
        %668 = vmatprep.subr.mxu0 %v579
        %669 = vmatpush1.msra.mxu0 %v578
        %670 = vmatprep.subr.mxu0 %v571
        %671 = vmatpush1.msra.mxu0 %v570
        %672 = vmatprep.subr.mxu0 0.0
        %673 = vmatpush2.msra.mxu0 0.0
        %674 = vmatprep.subr.mxu0 0.0
        %675 = vmatpush2.msra.mxu0 0.0
        %676 = vmatprep.subr.mxu0 0.0
        %677 = vmatpush2.msra.mxu0 0.0
        %678 = vmatprep.subr.mxu0 0.0
        %679 = vmatpush2.msra.mxu0 0.0
        %680 = vmatprep.subr.mxu0 0.0
        %681 = vmatpush2.msra.mxu0 0.0
        %682 = vmatprep.subr.mxu0 0.0
        %683 = vmatpush2.msra.mxu0 0.0
        %684 = vmatprep.subr.mxu0 0.0
        %685 = vmatpush2.msra.mxu0 0.0
        %686 = vmatprep.subr.mxu0 0.0
        %687 = vmatpush2.msra.mxu0 0.0
        %688 = vmatprep.subr.mxu0 0.0
        %689 = vmatpush2.msra.mxu0 0.0
        %690 = vmatprep.subr.mxu0 0.0
        %691 = vmatpush2.msra.mxu0 0.0
        %692 = vmatprep.subr.mxu0 0.0
        %693 = vmatpush2.msra.mxu0 0.0
        %694 = vmatprep.subr.mxu0 0.0
        %695 = vmatpush2.msra.mxu0 0.0
        %696 = vmatprep.subr.mxu0 0.0
        %697 = vmatpush2.msra.mxu0 0.0
        %698 = vmatprep.subr.mxu0 0.0
        %699 = vmatpush2.msra.mxu0 0.0
        %700 = vmatprep.subr.mxu0 0.0
        %701 = vmatpush2.msra.mxu0 0.0
        %702 = vmatprep.subr.mxu0 0.0
        %703 = vmatpush2.msra.mxu0 0.0
        %704 = vmatprep.mubr.f32.mxu0 0.0
        %705 = vmatmul.mubr.f32.gmra.mxu0 %v638
        %v706 = vpop.f32.mrf.mxu0
        %v707 = vadd.f32 %v635, %v706
        %v708 = vpop.f32.mrf.mxu0
        %v709 = vadd.f32 %v635, %v708
        %710 = vdwg.mxu0
        %v711 = vld [vmem:[#allocation5] sm:$0xff]
        %s712 = scalar_lea.vmem %s5, 16
        %v713 = vld [vmem:[%s712] sm:$0xff]
        %715 = vset.pattern.permute.xlu0 0
        %716 = vperm.xlu0 %715, %v713
        %v717 = vpop.permute.xlu0 %716
        %vm719 = vcmask 64512
        %v721 = vsel %vm719, %v711, 0
        %723 = vmatprep.subr.mxu0 0.0
        %724 = vmatpush1.msra.mxu0 0.0
        %725 = vmatprep.subr.mxu0 0.0
        %726 = vmatpush1.msra.mxu0 0.0
        %727 = vmatprep.subr.mxu0 0.0
        %728 = vmatpush1.msra.mxu0 0.0
        %729 = vmatprep.subr.mxu0 0.0
        %730 = vmatpush1.msra.mxu0 0.0
        %731 = vmatprep.subr.mxu0 0.0
        %732 = vmatpush1.msra.mxu0 0.0
        %733 = vmatprep.subr.mxu0 0.0
        %734 = vmatpush1.msra.mxu0 0.0
        %735 = vmatprep.subr.mxu0 0.0
        %736 = vmatpush1.msra.mxu0 0.0
        %737 = vmatprep.subr.mxu0 0.0
        %738 = vmatpush1.msra.mxu0 0.0
        %739 = vmatprep.subr.mxu0 0.0
        %740 = vmatpush1.msra.mxu0 0.0
        %741 = vmatprep.subr.mxu0 0.0
        %742 = vmatpush1.msra.mxu0 0.0
        %743 = vmatprep.subr.mxu0 0.0
        %744 = vmatpush1.msra.mxu0 0.0
        %745 = vmatprep.subr.mxu0 0.0
        %746 = vmatpush1.msra.mxu0 0.0
        %747 = vmatprep.subr.mxu0 0.0
        %748 = vmatpush1.msra.mxu0 0.0
        %749 = vmatprep.subr.mxu0 0.0
        %750 = vmatpush1.msra.mxu0 0.0
        %751 = vmatprep.subr.mxu0 0.0
        %752 = vmatpush1.msra.mxu0 0.0
        %753 = vmatprep.subr.mxu0 %v282
        %754 = vmatpush1.msra.mxu0 %v281
        %755 = vmatprep.subr.mxu0 0.0
        %756 = vmatpush2.msra.mxu0 0.0
        %757 = vmatprep.subr.mxu0 0.0
        %758 = vmatpush2.msra.mxu0 0.0
        %759 = vmatprep.subr.mxu0 0.0
        %760 = vmatpush2.msra.mxu0 0.0
        %761 = vmatprep.subr.mxu0 0.0
        %762 = vmatpush2.msra.mxu0 0.0
        %763 = vmatprep.subr.mxu0 0.0
        %764 = vmatpush2.msra.mxu0 0.0
        %765 = vmatprep.subr.mxu0 0.0
        %766 = vmatpush2.msra.mxu0 0.0
        %767 = vmatprep.subr.mxu0 0.0
        %768 = vmatpush2.msra.mxu0 0.0
        %769 = vmatprep.subr.mxu0 0.0
        %770 = vmatpush2.msra.mxu0 0.0
        %771 = vmatprep.subr.mxu0 0.0
        %772 = vmatpush2.msra.mxu0 0.0
        %773 = vmatprep.subr.mxu0 0.0
        %774 = vmatpush2.msra.mxu0 0.0
        %775 = vmatprep.subr.mxu0 0.0
        %776 = vmatpush2.msra.mxu0 0.0
        %777 = vmatprep.subr.mxu0 0.0
        %778 = vmatpush2.msra.mxu0 0.0
        %779 = vmatprep.subr.mxu0 0.0
        %780 = vmatpush2.msra.mxu0 0.0
        %781 = vmatprep.subr.mxu0 0.0
        %782 = vmatpush2.msra.mxu0 0.0
        %783 = vmatprep.subr.mxu0 0.0
        %784 = vmatpush2.msra.mxu0 0.0
        %785 = vmatprep.subr.mxu0 0.0
        %786 = vmatpush2.msra.mxu0 0.0
        %787 = vmatprep.mubr.f32.mxu0 0.0
        %788 = vmatmul.mubr.f32.gmra.mxu0 %v721
        %v789 = vpop.f32.mrf.mxu0
        %v790 = vadd.f32 %v717, %v789
        %v791 = vpop.f32.mrf.mxu0
        %v792 = vadd.f32 %v717, %v791
        %793 = vdwg.mxu0
        %v794 = vadd.f32 %v707, %v790
        %v795 = vadd.f32 %v709, %v792
        %vm796 = vcmp.gt.f32.partialorder %v794, 0.0
        %vm797 = vcmp.gt.f32.partialorder %v795, 0.0
        %v798 = vmul.f32 %v794, 0.2
        %v799 = vmul.f32 %v795, 0.2
        %v800 = vsel %vm796, %v794, %v798
        %v801 = vsel %vm797, %v795, %v799
        %802 = vst [vmem:[%s280] sm:$0xff] %v800
        %803 = vst [vmem:[%s280 + $0x8] sm:$0xff] %v801
        %s804 = sand.u32 %s163, 1
        %s805 = scalar_lea.sflag [#allocation4], %s804
        %s806 = sand.u32 %s163, 1
        %s807 = smul.addr %s806, 16
        %s808 = scalar_lea.vmem [#allocation7], %s807
        // Predicated region
        $region53: #{tpu_custom_call.1} parent=43 // pred_check
          %p809 = pneg %p173
        $region54: #{tpu_custom_call.1} parent=43 // pred_check_branch
          %811 = sbr.rel (%p809) target = $region56
        $region55: #{tpu_custom_call.1} parent=43 // pred_region
          %s813 = ssub.s32 256, 256
          %814 = vsyncadd %s805, %s813
          %s815 = smul.addr %s24, 2
          %s816 = smul.addr %s815, 128
          %s817 = scalar_lea.hbm %s6, %s816
          %s819 = sshll.u32 %s808, 4
          %s820 = int_to_ptr.vmem [resolvable:$true] %s819
          %822 = dma.vmem_to_hbm [thread:$0]  %s820, 256, %s817, %s805
        $region56: #{tpu_custom_call.1} parent=43 // pred_fallthru
          _
      $region44: #{tpu_custom_call.1} parent=5 // pred_fallthru
        _
      %p823 = scmp.le.s32.totalorder 2, %s19
      // Predicated region
      $region57: #{tpu_custom_call.1} parent=5 // pred_check
        %p824 = pneg %p823
      $region58: #{tpu_custom_call.1} parent=5 // pred_check_branch
        %826 = sbr.rel (%p824) target = $region60
      $region59: #{tpu_custom_call.1} parent=5 // pred_region
        %s827 = ssub.s32 %s19, 2
        // Predicated region
        $region61: #{tpu_custom_call.1} parent=59 // pred_check
          %p828 = pneg %p179
        $region62: #{tpu_custom_call.1} parent=59 // pred_check_branch
          %830 = sbr.rel (%p828) target = $region64
        $region63: #{tpu_custom_call.1} parent=59 // pred_region
          %s831 = sand.u32 %s164, 1
          %s832 = scalar_lea.sflag [#allocation4], %s831
          %s833 = sand.u32 %s164, 1
          %s834 = smul.addr %s833, 16
          %s835 = scalar_lea.vmem [#allocation7], %s834
          %836 = dma.done %s832, 256
        $region64: #{tpu_custom_call.1} parent=59 // pred_fallthru
          _
      $region60: #{tpu_custom_call.1} parent=5 // pred_fallthru
        _
    $region6: #{tpu_custom_call.1} parent=1 // loop_footer
      %s23 = sadd.s32 1, %s19
    $region7: #{tpu_custom_call.1} parent=1 // loop_footer_branch
      %18 = sbr.rel target = $region3
    $region8: #{tpu_custom_call.1} parent=1 // loop_exit
      _
    %837 = vsyncpa [#allocation3], 1
    %s838 = scalar_lea.sflag [#allocation3], 1
    %839 = vsyncpa %s838, 1
    %840 = vsyncpa [#allocation6], 1
    %841 = vsyncpa [#allocation4], 1
    %s842 = scalar_lea.sflag [#allocation4], 1
    %843 = vsyncpa %s842, 1

</llo_original>
